<compile_context>
chip_gen: v5e
topology: v5e:2x2
jax: 0.10.0
libtpu: 0.0.40
codegen_flags: <defaults>
</compile_context>

<pallas_src>
import jax
import jax.numpy as jnp
from jax.experimental import pallas as pl
from jax.experimental.pallas import tpu as pltpu


# Cap on images packed into one grid step: bounds the static unroll of the
# per-image store/pool loop and keeps the per-step block VMEM-bounded even on
# v7x (64 MiB VMEM) as B grows; extra images become extra grid steps.
_MAX_IMGS_PER_STEP = 8


def _num_tensorcores() -> int:
    """TensorCores per chip that `dimension_semantics='parallel'` can use.

    v5e / v6e expose 1 TC per chip (an extra grid step there is pure ~600-cycle
    overhead); v7x has 2 TCs per chip.
    """
    try:
        kind = jax.devices()[0].device_kind.lower()
    except Exception:
        return 1
    return 2 if "v7" in kind else 1


# ---------------------------------------------------------------------------
# Fused kernel: conv3x3 (one im2col MXU matmul per step) + bias + ReLU, AND the
# exit branch (global average pool + linear head), for `n` images per step.
# ---------------------------------------------------------------------------
def fused_conv_exit_kernel(patch_ref, w2_ref, bcol_ref, fcw_ref, fcb_ref,
                           y_ref, exit_ref):
    # patch_ref : (9*Cin, n*H*W)  bf16 im2col patches, lane = image-major spatial
    # w2_ref    : (Cout, 9*Cin)   bf16 conv weight, im2col row order
    # bcol_ref  : (Cout, 1)       f32 conv bias (column)
    # fcw_ref   : (Cout, n_cls)   f32 linear head weight
    # fcb_ref   : (1, n_cls)      f32 linear head bias (row)
    # y_ref     : (n, Cout, H*W)  lane-dense conv+ReLU output
    # exit_ref  : (n, 1, n_cls)   exit logits
    n, c_out, hw = y_ref.shape
    inv_hw = 1.0 / float(hw)

    # One MXU matmul for the whole step: (Cout, KC) x (KC, n*HW) -> f32 acc.
    acc = jnp.dot(w2_ref[...], patch_ref[...],
                  preferred_element_type=jnp.float32)          # (Cout, n*HW) f32
    y = jnp.maximum(acc + bcol_ref[...], 0.0)                  # bias + ReLU, one broadcast/step

    fcw = fcw_ref[...]
    fcb = fcb_ref[...]
    # Static unroll, bounded by _MAX_IMGS_PER_STEP; slices start at multiples of
    # HW (=256 here), i.e. whole-vreg lane groups -> no relayout.
    for i in range(n):
        y_i = y[:, i * hw:(i + 1) * hw]                        # (Cout, HW) static slice
        y_ref[i] = y_i.astype(y_ref.dtype)                     # lane-dense store

        # exit_branch on the f32 accumulator already in vregs:
        pooled = jnp.sum(y_i, axis=1, keepdims=True) * inv_hw  # (Cout, 1)  lane-reduce
        # logits[j] = sum_c fcw[c, j] * pooled[c] + fcb[j]
        logits = jnp.sum(fcw * pooled, axis=0, keepdims=True) + fcb   # (1, n_cls)
        exit_ref[i] = logits.astype(exit_ref.dtype)


# ---------------------------------------------------------------------------
# Python wrapper: im2col prep (layout plumbing), pallas_call, metadata reshapes.
# ---------------------------------------------------------------------------
def exit_wrapper_block(x_nchw, conv_w, conv_b, fc_w, fc_b):
    """Returns (y_nchw, exit_result) — forward()'s return value and the
    squeezed `self.exit_result` side output of shape (B, n_classes).
    Note: exit_result inherits x's dtype (a bf16 x gives bf16 logits)."""
    B, Cin, H, W = x_nchw.shape
    Cout = conv_w.shape[3]
    n_classes = fc_w.shape[1]
    HW = H * W
    KC = 9 * Cin

    # --- generation-aware grid: 1 step on v5e/v6e, 2 parallel steps on v7x;
    # pad odd/large B up to grid_steps * imgs_per_step instead of B tiny steps.
    num_cores = _num_tensorcores()
    grid_steps = min(max(num_cores, pl.cdiv(B, _MAX_IMGS_PER_STEP)), B)
    imgs_per_step = pl.cdiv(B, grid_steps)
    B_pad = grid_steps * imgs_per_step

    x_p = x_nchw
    if B_pad != B:
        x_p = jnp.pad(x_nchw, ((0, B_pad - B), (0, 0), (0, 0), (0, 0)))

    # --- transposed im2col grouped per grid step: (G, 9*Cin, imgs_per_step*HW)
    # Row order: tap-major, cin-inner (matches weight reshape below).
    # Lane order per step: image-major then spatial, so the kernel does ONE
    # (Cout,KC)x(KC,n*HW) matmul and per-image slices are HW-aligned.
    # TODO(synk): at large resolutions build the 9 taps in-kernel from a
    # lane-dense (Cin, H*W) block via pltpu.roll + edge masks (and bump the
    # patches BlockSpec to pl.Buffered(3) if DMA shows exposed) to avoid this
    # 9x im2col HBM expansion; at tc_snn sizes it is negligible.
    compute_dtype = jnp.bfloat16
    x_pad = jnp.pad(x_p, ((0, 0), (0, 0), (1, 1), (1, 1)))
    taps = []
    for kh in range(3):
        for kw in range(3):
            t = x_pad[:, :, kh:kh + H, kw:kw + W]
            t = t.reshape(grid_steps, imgs_per_step, Cin, HW)
            t = jnp.transpose(t, (0, 2, 1, 3)).reshape(grid_steps, Cin,
                                                       imgs_per_step * HW)
            taps.append(t)
    patches = jnp.concatenate(taps, axis=1).astype(compute_dtype)   # (G, KC, n*HW)

    # conv weight (3,3,Cin,Cout) -> (Cout, 9*Cin) matching patch row order.
    w2 = jnp.transpose(conv_w, (3, 0, 1, 2)).reshape(Cout, KC).astype(compute_dtype)
    bcol = conv_b.reshape(Cout, 1).astype(jnp.float32)
    fcw = fc_w.astype(jnp.float32)
    fcb_row = fc_b.reshape(1, n_classes).astype(jnp.float32)

    nHW = imgs_per_step * HW

    y_flat, exit_out = pl.pallas_call(
        fused_conv_exit_kernel,
        out_shape=(
            jax.ShapeDtypeStruct((B_pad, Cout, HW), x_nchw.dtype),
            jax.ShapeDtypeStruct((B_pad, 1, n_classes), x_nchw.dtype),
        ),
        grid_spec=pltpu.PrefetchScalarGridSpec(
            num_scalar_prefetch=0,
            grid=(grid_steps,),
            in_specs=[
                pl.BlockSpec((None, KC, nHW), lambda g: (g, 0, 0)),
                pl.BlockSpec((Cout, KC), lambda g: (0, 0)),
                pl.BlockSpec((Cout, 1), lambda g: (0, 0)),
                pl.BlockSpec((Cout, n_classes), lambda g: (0, 0)),
                pl.BlockSpec((1, n_classes), lambda g: (0, 0)),
            ],
            out_specs=[
                pl.BlockSpec((imgs_per_step, Cout, HW), lambda g: (g, 0, 0)),
                pl.BlockSpec((imgs_per_step, 1, n_classes), lambda g: (g, 0, 0)),
            ],
        ),
        compiler_params=pltpu.CompilerParams(
            dimension_semantics=("parallel",)),
    )(patches, w2, bcol, fcw, fcb_row)

    # Lane-dense (B, Cout, H*W) -> NCHW is a pure metadata reshape (no copy).
    y_nchw = y_flat[:B].reshape(B, Cout, H, W)
    exit_result = exit_out[:B].reshape(B, n_classes)   # the torch.squeeze()
    return y_nchw, exit_result


# ---------------------------------------------------------------------------
# Pure-JAX reference for verification (f32 math).
# ---------------------------------------------------------------------------
def reference(x_nchw, conv_w, conv_b, fc_w, fc_b):
    y = jax.lax.conv_general_dilated(
        x_nchw.astype(jnp.float32),
        jnp.transpose(conv_w, (3, 2, 0, 1)).astype(jnp.float32),  # OIHW
        window_strides=(1, 1), padding="SAME",
        dimension_numbers=("NCHW", "OIHW", "NCHW"))
    y = jnp.maximum(y + conv_b[None, :, None, None], 0.0)
    pooled = jnp.mean(y, axis=(2, 3))                             # (B, Cout)
    exit_r = pooled @ fc_w + fc_b[None, :]
    return y.astype(x_nchw.dtype), exit_r.astype(x_nchw.dtype)


if __name__ == "__main__":
    B, Cin, H, W = 2, 4, 16, 16
    Cout, n_classes = 8, 10
    threshold, lossweight = 0.5, 0.3   # module attrs; unused in forward math

    key = jax.random.PRNGKey(0)
    k1, k2, k3, k4, k5 = jax.random.split(key, 5)
    x = jax.random.normal(k1, (B, Cin, H, W), dtype=jnp.float32)
    conv_w = jax.random.normal(k2, (3, 3, Cin, Cout), dtype=jnp.float32) * 0.1
    conv_b = jax.random.normal(k3, (Cout,), dtype=jnp.float32) * 0.1
    fc_w = jax.random.normal(k4, (Cout, n_classes), dtype=jnp.float32) * 0.1
    fc_b = jax.random.normal(k5, (n_classes,), dtype=jnp.float32) * 0.1

    y, exit_result = jax.jit(exit_wrapper_block)(x, conv_w, conv_b, fc_w, fc_b)
    jax.block_until_ready((y, exit_result))

    y_ref, exit_ref = reference(x, conv_w, conv_b, fc_w, fc_b)
    assert y.shape == (B, Cout, H, W)
    assert exit_result.shape == (B, n_classes)
    # bf16 MXU inputs (f32 accumulation) -> loosened tolerance vs the f32 ref.
    assert jnp.allclose(y, y_ref, atol=2e-2, rtol=2e-2)
    assert jnp.allclose(exit_result, exit_ref, atol=2e-2, rtol=2e-2)

    print("KERNEL_OK")
</pallas_src>

<mosaic_0001>
module attributes {stable_mosaic.version = 11 : i64} {
  func.func @fused_conv_exit_kernel(%arg0: i32, %arg1: memref<1x36x512xbf16, #tpu.memory_space<vmem>>, %arg2: memref<8x36xbf16, #tpu.memory_space<vmem>>, %arg3: memref<8x1xf32, #tpu.memory_space<vmem>>, %arg4: memref<8x10xf32, #tpu.memory_space<vmem>>, %arg5: memref<1x10xf32, #tpu.memory_space<vmem>>, %arg6: memref<2x8x256xf32, #tpu.memory_space<vmem>>, %arg7: memref<2x1x10xf32, #tpu.memory_space<vmem>>) attributes {dimension_semantics = [#tpu.dimension_semantics<parallel>], iteration_bounds = array<i64: 1>, scalar_prefetch = 0 : i64, scratch_operands = 0 : i64, tpu.core_type = #tpu.core_type<tc>, window_params = [{transform_indices = @transform_0, window_bounds = array<i64: 1, 36, 512>}, {pipeline_mode = #tpu.pipeline_mode<synchronous>, transform_indices = @transform_1, window_bounds = array<i64: 8, 36>}, {pipeline_mode = #tpu.pipeline_mode<synchronous>, transform_indices = @transform_2, window_bounds = array<i64: 8, 1>}, {pipeline_mode = #tpu.pipeline_mode<synchronous>, transform_indices = @transform_3, window_bounds = array<i64: 8, 10>}, {pipeline_mode = #tpu.pipeline_mode<synchronous>, transform_indices = @transform_4, window_bounds = array<i64: 1, 10>}, {transform_indices = @transform_5, window_bounds = array<i64: 2, 8, 256>}, {transform_indices = @transform_6, window_bounds = array<i64: 2, 1, 10>}]} {
    %c0 = arith.constant 0 : index
    %c0_0 = arith.constant 0 : index
    %0 = vector.load %arg2[%c0, %c0_0] : memref<8x36xbf16, #tpu.memory_space<vmem>>, vector<8x36xbf16>
    %c0_1 = arith.constant 0 : index
    %c0_2 = arith.constant 0 : index
    %c0_3 = arith.constant 0 : index
    %1 = vector.load %arg1[%c0_1, %c0_2, %c0_3] : memref<1x36x512xbf16, #tpu.memory_space<vmem>>, vector<1x36x512xbf16>
    %2 = vector.shape_cast %1 : vector<1x36x512xbf16> to vector<36x512xbf16>
    %cst = arith.constant dense<0.000000e+00> : vector<8x512xf32>
    %3 = tpu.matmul %0, %2, %cst {dimension_numbers = #tpu.dot_dimension_numbers<[1], [0], [0], [1], [0, 0, 1, 1], [], []>} : vector<8x36xbf16>, vector<36x512xbf16>, vector<8x512xf32> -> vector<8x512xf32>
    %c0_4 = arith.constant 0 : index
    %c0_5 = arith.constant 0 : index
    %4 = vector.load %arg3[%c0_4, %c0_5] : memref<8x1xf32, #tpu.memory_space<vmem>>, vector<8x1xf32>
    %5 = vector.broadcast %4 : vector<8x1xf32> to vector<8x512xf32>
    %6 = arith.addf %3, %5 : vector<8x512xf32>
    %cst_6 = arith.constant 0.000000e+00 : f32
    %7 = vector.broadcast %cst_6 : f32 to vector<8x512xf32>
    %8 = arith.maximumf %6, %7 : vector<8x512xf32>
    %c0_7 = arith.constant 0 : index
    %c0_8 = arith.constant 0 : index
    %9 = vector.load %arg4[%c0_7, %c0_8] : memref<8x10xf32, #tpu.memory_space<vmem>>, vector<8x10xf32>
    %c0_9 = arith.constant 0 : index
    %c0_10 = arith.constant 0 : index
    %10 = vector.load %arg5[%c0_9, %c0_10] : memref<1x10xf32, #tpu.memory_space<vmem>>, vector<1x10xf32>
    %11 = vector.extract_strided_slice %8 {offsets = [0, 0], sizes = [8, 256], strides = [1, 1]} : vector<8x512xf32> to vector<8x256xf32>
    %c0_11 = arith.constant 0 : index
    %c0_12 = arith.constant 0 : index
    %c0_13 = arith.constant 0 : index
    %12 = vector.load %arg6[%c0_11, %c0_12, %c0_13] : memref<2x8x256xf32, #tpu.memory_space<vmem>>, vector<1x8x256xf32>
    %13 = vector.shape_cast %12 : vector<1x8x256xf32> to vector<8x256xf32>
    %14 = vector.shape_cast %11 : vector<8x256xf32> to vector<1x8x256xf32>
    tpu.vector_store %arg6[%c0_11, %c0_12, %c0_13], %14 {strides = array<i32>} : memref<2x8x256xf32, #tpu.memory_space<vmem>>, vector<1x8x256xf32>,
    %cst_14 = arith.constant dense<0.000000e+00> : vector<8xf32>
    %15 = vector.multi_reduction <add>, %11, %cst_14 [1] : vector<8x256xf32> to vector<8xf32>
    %16 = vector.shape_cast %15 : vector<8xf32> to vector<8x1xf32>
    %cst_15 = arith.constant 3.906250e-03 : f32
    %17 = vector.broadcast %cst_15 : f32 to vector<8x1xf32>
    %18 = arith.mulf %16, %17 : vector<8x1xf32>
    %19 = vector.broadcast %18 : vector<8x1xf32> to vector<8x10xf32>
    %20 = arith.mulf %9, %19 : vector<8x10xf32>
    %cst_16 = arith.constant dense<0.000000e+00> : vector<10xf32>
    %21 = vector.multi_reduction <add>, %20, %cst_16 [0] : vector<8x10xf32> to vector<10xf32>
    %22 = vector.shape_cast %21 : vector<10xf32> to vector<1x10xf32>
    %23 = arith.addf %22, %10 : vector<1x10xf32>
    %c0_17 = arith.constant 0 : index
    %c0_18 = arith.constant 0 : index
    %c0_19 = arith.constant 0 : index
    %24 = vector.load %arg7[%c0_17, %c0_18, %c0_19] : memref<2x1x10xf32, #tpu.memory_space<vmem>>, vector<1x1x10xf32>
    %25 = vector.shape_cast %24 : vector<1x1x10xf32> to vector<1x10xf32>
    %26 = vector.shape_cast %23 : vector<1x10xf32> to vector<1x1x10xf32>
    tpu.vector_store %arg7[%c0_17, %c0_18, %c0_19], %26 {strides = array<i32>} : memref<2x1x10xf32, #tpu.memory_space<vmem>>, vector<1x1x10xf32>,
    %27 = vector.extract_strided_slice %8 {offsets = [0, 256], sizes = [8, 256], strides = [1, 1]} : vector<8x512xf32> to vector<8x256xf32>
    %c1 = arith.constant 1 : index
    %c0_20 = arith.constant 0 : index
    %c0_21 = arith.constant 0 : index
    %28 = vector.load %arg6[%c1, %c0_20, %c0_21] : memref<2x8x256xf32, #tpu.memory_space<vmem>>, vector<1x8x256xf32>
    %29 = vector.shape_cast %28 : vector<1x8x256xf32> to vector<8x256xf32>
    %30 = vector.shape_cast %27 : vector<8x256xf32> to vector<1x8x256xf32>
    tpu.vector_store %arg6[%c1, %c0_20, %c0_21], %30 {strides = array<i32>} : memref<2x8x256xf32, #tpu.memory_space<vmem>>, vector<1x8x256xf32>,
    %cst_22 = arith.constant dense<0.000000e+00> : vector<8xf32>
    %31 = vector.multi_reduction <add>, %27, %cst_22 [1] : vector<8x256xf32> to vector<8xf32>
    %32 = vector.shape_cast %31 : vector<8xf32> to vector<8x1xf32>
    %cst_23 = arith.constant 3.906250e-03 : f32
    %33 = vector.broadcast %cst_23 : f32 to vector<8x1xf32>
    %34 = arith.mulf %32, %33 : vector<8x1xf32>
    %35 = vector.broadcast %34 : vector<8x1xf32> to vector<8x10xf32>
    %36 = arith.mulf %9, %35 : vector<8x10xf32>
    %cst_24 = arith.constant dense<0.000000e+00> : vector<10xf32>
    %37 = vector.multi_reduction <add>, %36, %cst_24 [0] : vector<8x10xf32> to vector<10xf32>
    %38 = vector.shape_cast %37 : vector<10xf32> to vector<1x10xf32>
    %39 = arith.addf %38, %10 : vector<1x10xf32>
    %c1_25 = arith.constant 1 : index
    %c0_26 = arith.constant 0 : index
    %c0_27 = arith.constant 0 : index
    %40 = vector.load %arg7[%c1_25, %c0_26, %c0_27] : memref<2x1x10xf32, #tpu.memory_space<vmem>>, vector<1x1x10xf32>
    %41 = vector.shape_cast %40 : vector<1x1x10xf32> to vector<1x10xf32>
    %42 = vector.shape_cast %39 : vector<1x10xf32> to vector<1x1x10xf32>
    tpu.vector_store %arg7[%c1_25, %c0_26, %c0_27], %42 {strides = array<i32>} : memref<2x1x10xf32, #tpu.memory_space<vmem>>, vector<1x1x10xf32>,
    return
  }
  func.func @transform_0(%arg0: i32) -> (i32, i32, i32) {
    %c0_i32 = arith.constant 0 : i32
    %c0_i32_0 = arith.constant 0 : i32
    %c0_i32_1 = arith.constant 0 : i32
    return %arg0, %c0_i32, %c0_i32_0 : i32, i32, i32
  }
  func.func @transform_1(%arg0: i32) -> (i32, i32) {
    %c0_i32 = arith.constant 0 : i32
    %c0_i32_0 = arith.constant 0 : i32
    %c0_i32_1 = arith.constant 0 : i32
    return %c0_i32, %c0_i32_0 : i32, i32
  }
  func.func @transform_2(%arg0: i32) -> (i32, i32) {
    %c0_i32 = arith.constant 0 : i32
    %c0_i32_0 = arith.constant 0 : i32
    %c0_i32_1 = arith.constant 0 : i32
    return %c0_i32, %c0_i32_0 : i32, i32
  }
  func.func @transform_3(%arg0: i32) -> (i32, i32) {
    %c0_i32 = arith.constant 0 : i32
    %c0_i32_0 = arith.constant 0 : i32
    %c0_i32_1 = arith.constant 0 : i32
    return %c0_i32, %c0_i32_0 : i32, i32
  }
  func.func @transform_4(%arg0: i32) -> (i32, i32) {
    %c0_i32 = arith.constant 0 : i32
    %c0_i32_0 = arith.constant 0 : i32
    %c0_i32_1 = arith.constant 0 : i32
    return %c0_i32, %c0_i32_0 : i32, i32
  }
  func.func @transform_5(%arg0: i32) -> (i32, i32, i32) {
    %c0_i32 = arith.constant 0 : i32
    %c0_i32_0 = arith.constant 0 : i32
    %c0_i32_1 = arith.constant 0 : i32
    return %arg0, %c0_i32, %c0_i32_0 : i32, i32, i32
  }
  func.func @transform_6(%arg0: i32) -> (i32, i32, i32) {
    %c0_i32 = arith.constant 0 : i32
    %c0_i32_0 = arith.constant 0 : i32
    %c0_i32_1 = arith.constant 0 : i32
    return %arg0, %c0_i32, %c0_i32_0 : i32, i32, i32
  }
}

</mosaic_0001>

<llo_original>
// kernel: exit_wrapper_block.1
$region0: #{exit_wrapper_block.1}
  #allocation0 [shape = 'u32[]', space=smem, size = 0x4, offset = 0x4, fixed_abs, tag = 'smem constant byte address 0x4 - core index']
  #allocation1 [shape = 'u32[72,128]{1,0:T(1,128)}', space=vmem, size = 0x9000, scoped, tag = 'internal scratch']
  %s0 = inlined_call_operand.vmem [shape: bf16[1,36,512], index: 0, kind: input, shape index: {}]
  %s1 = inlined_call_operand.vmem [shape: bf16[8,36], index: 1, kind: input, shape index: {}]
  %s2 = inlined_call_operand.vmem [shape: f32[8,1], index: 2, kind: input, shape index: {}]
  %s3 = inlined_call_operand.vmem [shape: f32[8,10], index: 3, kind: input, shape index: {}]
  %s4 = inlined_call_operand.vmem [shape: f32[1,10], index: 4, kind: input, shape index: {}]
  %s5 = inlined_call_operand.vmem [shape: f32[2,8,256], index: 5, kind: output, shape index: {0}]
  %s6 = inlined_call_operand.hbm [shape: f32[2,1,10], index: 6, kind: output, shape index: {1}]
  %7 = xla_tuple %s5, %s6
  %s8 = sld [smem:[#allocation0]]
  $region38: #{exit_wrapper_block.1} parent=0
    _
  %s10 = ssub.s32 1, %s8
  %s11 = scalar_select 0, %s10, %s8
  $region1: #{exit_wrapper_block.1} parent=0
    #allocation2 [shape = 'u8[1024]{0}', space=vmem, size = 0x400, scoped, tag = 'output window, operand 1, single buffered']
    #allocation3 [shape = 's32[1]{0}', space=sflag, size = 0x4, scoped, tag = 'scoped memory for exit_wrapper_block.1']
    %12 = vsyncpa [#allocation3], 0
    // Predicated region
    $region2: #{exit_wrapper_block.1} parent=1 // pred_check
      _
    $region3: #{exit_wrapper_block.1} parent=1 // pred_check_branch
      %14 = sbr.rel (0) target = $region5
    $region4: #{exit_wrapper_block.1} parent=1 // pred_region
      _
    $region5: #{exit_wrapper_block.1} parent=1 // pred_fallthru
      _
    // Predicated region
    $region6: #{exit_wrapper_block.1} parent=1 // pred_check
      _
    $region7: #{exit_wrapper_block.1} parent=1 // pred_check_branch
      %16 = sbr.rel (0) target = $region9
    $region8: #{exit_wrapper_block.1} parent=1 // pred_region
      _
    $region9: #{exit_wrapper_block.1} parent=1 // pred_fallthru
      _
    // Predicated region
    $region10: #{exit_wrapper_block.1} parent=1 // pred_check
      _
    $region11: #{exit_wrapper_block.1} parent=1 // pred_check_branch
      %18 = sbr.rel (0) target = $region13
    $region12: #{exit_wrapper_block.1} parent=1 // pred_region
      _
    $region13: #{exit_wrapper_block.1} parent=1 // pred_fallthru
      _
    // Predicated region
    $region14: #{exit_wrapper_block.1} parent=1 // pred_check
      _
    $region15: #{exit_wrapper_block.1} parent=1 // pred_check_branch
      %20 = sbr.rel (0) target = $region17
    $region16: #{exit_wrapper_block.1} parent=1 // pred_region
      _
    $region17: #{exit_wrapper_block.1} parent=1 // pred_fallthru
      _
    // Predicated region
    $region18: #{exit_wrapper_block.1} parent=1 // pred_check
      _
    $region19: #{exit_wrapper_block.1} parent=1 // pred_check_branch
      %22 = sbr.rel (0) target = $region21
    $region20: #{exit_wrapper_block.1} parent=1 // pred_region
      _
    $region21: #{exit_wrapper_block.1} parent=1 // pred_fallthru
      _
    %v24 = vld [vmem:[%s1] sm:$0xf]
    %v25 = vld [vmem:[%s0] sm:$0xff]
    %v26 = vld [vmem:[%s0 + $0x8] sm:$0xff]
    %v27 = vld [vmem:[%s0 + $0x10] sm:$0xff]
    %v28 = vld [vmem:[%s0 + $0x18] sm:$0xff]
    %v29 = vld [vmem:[%s0 + $0x20] sm:$0xff]
    %v30 = vld [vmem:[%s0 + $0x28] sm:$0xff]
    %v31 = vld [vmem:[%s0 + $0x30] sm:$0xff]
    %v32 = vld [vmem:[%s0 + $0x38] sm:$0xff]
    %v33 = vld [vmem:[%s0 + $0x40] sm:$0x33]
    %v34 = vld [vmem:[%s0 + $0x48] sm:$0x33]
    %v35 = vld [vmem:[%s2] sm:$0xff]
    %37 = vset.pattern.permute.xlu0 0
    %38 = vperm.xlu0 %37, %v35
    %v39 = vpop.permute.xlu0 %38
    %v51 = vunpack.c.l.b16 %v25
    %v52 = vunpack.c.h.b16 %v25
    %v53 = vunpack.c.l.b16 %v26
    %v54 = vunpack.c.h.b16 %v26
    %v55 = vunpack.c.l.b16 %v27
    %v56 = vunpack.c.h.b16 %v27
    %v57 = vunpack.c.l.b16 %v28
    %v58 = vunpack.c.h.b16 %v28
    %v59 = vunpack.c.l.b16 %v29
    %v60 = vunpack.c.h.b16 %v29
    %v61 = vunpack.c.l.b16 %v30
    %v62 = vunpack.c.h.b16 %v30
    %v63 = vunpack.c.l.b16 %v31
    %v64 = vunpack.c.h.b16 %v31
    %v65 = vunpack.c.l.b16 %v32
    %v66 = vunpack.c.h.b16 %v32
    %v67 = vunpack.c.l.b16 %v33
    %v68 = vunpack.c.h.b16 %v33
    %v69 = vunpack.c.l.b16 %v34
    %v70 = vunpack.c.h.b16 %v34
    %v71 = vpack.c.b16 %v55, %v51
    %v72 = vpack.c.b16 %v56, %v52
    %v73 = vpack.c.b16 %v57, %v53
    %v74 = vpack.c.b16 %v58, %v54
    %v75 = vpack.c.b16 %v63, %v59
    %v76 = vpack.c.b16 %v64, %v60
    %v77 = vpack.c.b16 %v65, %v61
    %v78 = vpack.c.b16 %v66, %v62
    %v79 = vpack.c.b16 %v67, %v67
    %v80 = vpack.c.b16 %v68, %v68
    %v81 = vpack.c.b16 %v69, %v69
    %v82 = vpack.c.b16 %v70, %v70
    %vm91 = vcmask 293888
    %v93 = vsel %vm91, %v24, 0
    %vm95 = vcmask 1041408
    %v97 = vsel %vm95, %v79, 0
    %v100 = vsel %vm95, %v80, 0
    %v103 = vsel %vm95, %v81, 0
    %v106 = vsel %vm95, %v82, 0
    %108 = vmatpush.bf16.msra.mxu0 0
    %109 = vmatpush.bf16.msra.mxu0 0
    %110 = vmatpush.bf16.msra.mxu0 0
    %111 = vmatpush.bf16.msra.mxu0 0
    %112 = vmatpush.bf16.msra.mxu0 0
    %113 = vmatpush.bf16.msra.mxu0 %v97
    %114 = vmatpush.bf16.msra.mxu0 %v75
    %115 = vmatpush.bf16.msra.mxu0 %v71
    %116 = vmatmul.bf16.gmra.mxu0 %v93
    %v117 = vpop.f32.mrf.mxu0
    %v118 = vadd.f32 %v39, %v117
    %v119 = vpop.f32.mrf.mxu0
    %120 = vdwg.mxu0
    %121 = vmatpush.bf16.msra.mxu0 0
    %122 = vmatpush.bf16.msra.mxu0 0
    %123 = vmatpush.bf16.msra.mxu0 0
    %124 = vmatpush.bf16.msra.mxu0 0
    %125 = vmatpush.bf16.msra.mxu0 0
    %126 = vmatpush.bf16.msra.mxu0 %v100
    %127 = vmatpush.bf16.msra.mxu0 %v76
    %128 = vmatpush.bf16.msra.mxu0 %v72
    %129 = vmatmul.bf16.gmra.mxu0 %v93
    %v130 = vpop.f32.mrf.mxu0
    %v131 = vadd.f32 %v39, %v130
    %v132 = vpop.f32.mrf.mxu0
    %133 = vdwg.mxu0
    %134 = vmatpush.bf16.msra.mxu0 0
    %135 = vmatpush.bf16.msra.mxu0 0
    %136 = vmatpush.bf16.msra.mxu0 0
    %137 = vmatpush.bf16.msra.mxu0 0
    %138 = vmatpush.bf16.msra.mxu0 0
    %139 = vmatpush.bf16.msra.mxu0 %v103
    %140 = vmatpush.bf16.msra.mxu0 %v77
    %141 = vmatpush.bf16.msra.mxu0 %v73
    %142 = vmatmul.bf16.gmra.mxu0 %v93
    %v143 = vpop.f32.mrf.mxu0
    %v144 = vadd.f32 %v39, %v143
    %v145 = vpop.f32.mrf.mxu0
    %146 = vdwg.mxu0
    %147 = vmatpush.bf16.msra.mxu0 0
    %148 = vmatpush.bf16.msra.mxu0 0
    %149 = vmatpush.bf16.msra.mxu0 0
    %150 = vmatpush.bf16.msra.mxu0 0
    %151 = vmatpush.bf16.msra.mxu0 0
    %152 = vmatpush.bf16.msra.mxu0 %v106
    %153 = vmatpush.bf16.msra.mxu0 %v78
    %154 = vmatpush.bf16.msra.mxu0 %v74
    %155 = vmatmul.bf16.gmra.mxu0 %v93
    %v156 = vpop.f32.mrf.mxu0
    %v157 = vadd.f32 %v39, %v156
    %v158 = vpop.f32.mrf.mxu0
    %159 = vdwg.mxu0
    %v160 = vmax.f32 %v118, 0.0
    %v161 = vmax.f32 %v131, 0.0
    %v162 = vmax.f32 %v144, 0.0
    %v163 = vmax.f32 %v157, 0.0
    %v164 = vld [vmem:[%s3] sm:$0xff]
    %v165 = vld [vmem:[%s4] sm:$0x1]
    %166 = vst [vmem:[%s5] sm:$0xff] %v160
    %167 = vst [vmem:[%s5 + $0x8] sm:$0xff] %v161
    %v168 = vadd.f32 %v160, %v161
    %169 = vadd.xlane.f32.xlu0 %v168
    %v170 = vpop.xlane.xlu0 %169
    %v171 = vmul.f32 %v170, 0.00390625
    %v172 = vmul.f32 %v164, %v171
    %vm173 = vcmask 80896
    %v174 = vsel %vm173, %v172, 0.0
    %v175 = vrot.slane %v174, 4
    %v176 = vadd.f32 %v174, %v175
    %v177 = vrot.slane %v176, 2
    %v178 = vadd.f32 %v176, %v177
    %v179 = vrot.slane %v178, 1
    %v180 = vadd.f32 %v178, %v179
    %v181 = vadd.f32 %v180, %v165
    %vm182 = vcmask 73728
    %183 = vst.msk [vmem:[#allocation2] sm:$0x1] %vm182, %v181
    %s184 = scalar_lea.vmem %s5, 16
    %185 = vst [vmem:[%s184] sm:$0xff] %v162
    %186 = vst [vmem:[%s184 + $0x8] sm:$0xff] %v163
    %v187 = vadd.f32 %v162, %v163
    %188 = vadd.xlane.f32.xlu0 %v187
    %v189 = vpop.xlane.xlu0 %188
    %v190 = vmul.f32 %v189, 0.00390625
    %v191 = vmul.f32 %v164, %v190
    %v192 = vsel %vm173, %v191, 0.0
    %v193 = vrot.slane %v192, 4
    %v194 = vadd.f32 %v192, %v193
    %v195 = vrot.slane %v194, 2
    %v196 = vadd.f32 %v194, %v195
    %v197 = vrot.slane %v196, 1
    %v198 = vadd.f32 %v196, %v197
    %v199 = vadd.f32 %v198, %v165
    %s200 = scalar_lea.vmem [#allocation2], 1
    %201 = vst.msk [vmem:[%s200] sm:$0x1] %vm182, %v199
    // Predicated region
    $region22: #{exit_wrapper_block.1} parent=1 // pred_check
      _
    $region23: #{exit_wrapper_block.1} parent=1 // pred_check_branch
      %203 = sbr.rel (0) target = $region25
    $region24: #{exit_wrapper_block.1} parent=1 // pred_region
      _
    $region25: #{exit_wrapper_block.1} parent=1 // pred_fallthru
      _
    // Predicated region
    $region26: #{exit_wrapper_block.1} parent=1 // pred_check
      _
    $region27: #{exit_wrapper_block.1} parent=1 // pred_check_branch
      %205 = sbr.rel (0) target = $region29
    $region28: #{exit_wrapper_block.1} parent=1 // pred_region
      %207 = vsyncadd [#allocation3], 0
      %s208 = sshll.u32 [#allocation2], 4
      %s209 = int_to_ptr.vmem [resolvable:$true] %s208
      %s210 = sshll.u32 %s6, 4
      %s211 = int_to_ptr.hbm [resolvable:$true] %s210
      %216 = dma.vmem_to_hbm [thread:$0]  %s209, 32, %s211, [#allocation3], 16, 16, 1
    $region29: #{exit_wrapper_block.1} parent=1 // pred_fallthru
      _
    // Predicated region
    $region30: #{exit_wrapper_block.1} parent=1 // pred_check
      _
    $region31: #{exit_wrapper_block.1} parent=1 // pred_check_branch
      %218 = sbr.rel (0) target = $region33
    $region32: #{exit_wrapper_block.1} parent=1 // pred_region
      _
    $region33: #{exit_wrapper_block.1} parent=1 // pred_fallthru
      _
    // Predicated region
    $region34: #{exit_wrapper_block.1} parent=1 // pred_check
      _
    $region35: #{exit_wrapper_block.1} parent=1 // pred_check_branch
      %220 = sbr.rel (0) target = $region37
    $region36: #{exit_wrapper_block.1} parent=1 // pred_region
      %222 = dma.done [#allocation3], 32
    $region37: #{exit_wrapper_block.1} parent=1 // pred_fallthru
      _
    %223 = vsyncpa [#allocation3], 1

</llo_original>
